<compile_context>
chip_gen: v7x
topology: tpu7x:2x2x1
jax: 0.10.0
libtpu: 0.0.40
codegen_flags: <defaults>
</compile_context>

<pallas_src>
import functools
import math

import jax
import jax.numpy as jnp
from jax.experimental import pallas as pl
from jax.experimental.pallas import tpu as pltpu


# ----------------------------- shared epilogue --------------------------------

def _mlp_epilogue(sum_col, max_col, w1t_ref, b1_ref, w2_ref, b2_ref, o_ref, inv_s):
    """sum_col/max_col: (C, 1) f32 pooled vectors. Writes sigmoid logits to o_ref."""
    w1t = w1t_ref[...].astype(jnp.float32)                       # (C, M)
    b1 = b1_ref[...].astype(jnp.float32)                         # (1, M)
    w2 = w2_ref[...].astype(jnp.float32)                         # (C, M)
    b2 = b2_ref[...].astype(jnp.float32)                         # (C, 1)

    def mlp(p_col):                                              # (C, 1) -> (C, 1)
        # fc1: h[m] = sum_c W1[m,c] * p[c] + b1[m]   (sublane reduce, once/batch)
        h = jnp.sum(w1t * p_col, axis=0, keepdims=True) + b1     # (1, M)
        h = jnp.maximum(h, 0.0)                                  # ReLU
        # fc2: z[c] = sum_m W2[c,m] * h[m] + b2[c]   (lane reduce, once/batch)
        return jnp.sum(w2 * h, axis=1, keepdims=True) + b2       # (C, 1)

    avg_col = sum_col * inv_s
    logits = mlp(avg_col) + mlp(max_col)                         # (C, 1)
    o_ref[...] = jax.nn.sigmoid(logits).astype(o_ref.dtype)


# ----------------------------- kernels -----------------------------------------

def _ca_kernel_packed(x_ref, w1t_ref, b1_ref, w2_ref, b2_ref, o_ref,
                      sum_sc, max_sc, *, inv_s, rows_total, rows_tile):
    """Sublane-packed path: x_ref is (C, rows_tile, 128); S % 128 == 0."""
    j = pl.program_id(1)

    @pl.when(j == 0)
    def _():
        sum_sc[...] = jnp.zeros_like(sum_sc)
        max_sc[...] = jnp.full_like(max_sc, -jnp.inf)

    x = x_ref[...].astype(jnp.float32)                           # (C, rt, 128)

    if rows_total % rows_tile != 0:
        # Tail tile extends past the array: mask invalid rows (OOB data is garbage).
        valid = rows_total - j * rows_tile                       # >= rows_tile for non-tail
        row_ids = jax.lax.broadcasted_iota(jnp.int32, x.shape, 1)
        in_range = row_ids < valid
        x_sum = jnp.where(in_range, x, 0.0)
        x_max = jnp.where(in_range, x, -jnp.inf)
    else:
        x_sum = x
        x_max = x

    # Per-step: VALU adds/maxes over full vregs + small sublane reduce -> (C, 128)
    sum_sc[...] += jnp.sum(x_sum, axis=1)                        # (C, 128)
    max_sc[...] = jnp.maximum(max_sc[...], jnp.max(x_max, axis=1))

    @pl.when(j == pl.num_programs(1) - 1)
    def _():
        # Single cross-lane reduce, once per batch element.
        sum_col = jnp.sum(sum_sc[...], axis=1, keepdims=True)    # (C, 1)
        max_col = jnp.max(max_sc[...], axis=1, keepdims=True)    # (C, 1)
        _mlp_epilogue(sum_col, max_col, w1t_ref, b1_ref, w2_ref, b2_ref, o_ref, inv_s)


def _ca_kernel_flat(x_ref, w1t_ref, b1_ref, w2_ref, b2_ref, o_ref,
                    sum_sc, max_sc, *, inv_s, s_total, s_tile):
    """Fallback path for S % 128 != 0: x_ref is (C, s_tile) with lane tail masking."""
    j = pl.program_id(1)

    @pl.when(j == 0)
    def _():
        sum_sc[...] = jnp.zeros_like(sum_sc)
        max_sc[...] = jnp.full_like(max_sc, -jnp.inf)

    x = x_ref[...].astype(jnp.float32)                           # (C, ts)

    if s_total % s_tile != 0:
        valid = s_total - j * s_tile
        lane_ids = jax.lax.broadcasted_iota(jnp.int32, x.shape, 1)
        in_range = lane_ids < valid
        x_sum = jnp.where(in_range, x, 0.0)
        x_max = jnp.where(in_range, x, -jnp.inf)
    else:
        x_sum = x
        x_max = x

    sum_sc[...] += jnp.sum(x_sum, axis=1, keepdims=True)         # (C, 1)
    max_sc[...] = jnp.maximum(max_sc[...],
                              jnp.max(x_max, axis=1, keepdims=True))

    @pl.when(j == pl.num_programs(1) - 1)
    def _():
        _mlp_epilogue(sum_sc[...], max_sc[...],
                      w1t_ref, b1_ref, w2_ref, b2_ref, o_ref, inv_s)


# ----------------------------- tile sizing --------------------------------------

def _round_up(v, m):
    return ((v + m - 1) // m) * m


def _pick_rows_tile(rows_total, C, itemsize, target_bytes):
    """Rows per tile so the (C, rt, 128) block is ~target_bytes, rt multiple of 8."""
    rt = (target_bytes // (C * 128 * itemsize)) // 8 * 8
    rt = max(8, int(rt))
    rt = min(rt, _round_up(rows_total, 8))
    return rt


def _pick_lane_tile(S, C, itemsize, target_bytes):
    """Lanes per tile so the (C, ts) block is ~target_bytes, ts multiple of 128."""
    ts = (target_bytes // (C * itemsize)) // 128 * 128
    ts = max(128, int(ts))
    ts = min(ts, _round_up(S, 128))
    return ts


# ----------------------------- wrapper ------------------------------------------

def channel_attention(x, fc1_w, fc1_b, fc2_w, fc2_b, *, target_tile_bytes=4 << 20):
    """x: (N, C, *spatial). fc1_w: (M, C), fc1_b: (M,), fc2_w: (C, M), fc2_b: (C,).

    Returns sigmoid channel attention of shape (N, C, 1, ..., 1) matching x.ndim.
    """
    N, C = x.shape[0], x.shape[1]
    S = int(math.prod(x.shape[2:]))
    M = fc1_w.shape[0]
    itemsize = x.dtype.itemsize

    w1t = fc1_w.T                   # (C, M)
    b1r = fc1_b.reshape(1, M)
    w2 = fc2_w                      # (C, M)
    b2c = fc2_b.reshape(C, 1)

    weight_specs = [
        pl.BlockSpec((C, M), lambda n, j: (0, 0)),               # fc1.weight.T
        pl.BlockSpec((1, M), lambda n, j: (0, 0)),               # fc1.bias
        pl.BlockSpec((C, M), lambda n, j: (0, 0)),               # fc2.weight
        pl.BlockSpec((C, 1), lambda n, j: (0, 0)),               # fc2.bias
    ]
    out_spec = pl.BlockSpec((None, C, 1), lambda n, j: (n, 0, 0))
    out_shape = jax.ShapeDtypeStruct((N, C, 1), x.dtype)

    if S % 128 == 0:
        # Sublane-packed path: free HBM-level reshape fills all 8 sublanes per vreg.
        rows_total = S // 128
        rt = _pick_rows_tile(rows_total, C, itemsize, target_tile_bytes)
        xr = x.reshape(N, C, rows_total, 128)
        grid = (N, pl.cdiv(rows_total, rt))
        in_tile_bytes = C * rt * 128 * itemsize
        kernel = functools.partial(_ca_kernel_packed, inv_s=1.0 / S,
                                   rows_total=rows_total, rows_tile=rt)
        x_spec = pl.BlockSpec((None, C, rt, 128), lambda n, j: (n, 0, j, 0))
        scratch = [pltpu.VMEM((C, 128), jnp.float32),            # lane-wide running sum
                   pltpu.VMEM((C, 128), jnp.float32)]            # lane-wide running max
    else:
        # General path: lane-dense tiles, cdiv grid, tail lanes masked in-kernel.
        ts = _pick_lane_tile(S, C, itemsize, target_tile_bytes)
        xr = x.reshape(N, C, S)
        grid = (N, pl.cdiv(S, ts))
        in_tile_bytes = C * ts * itemsize
        kernel = functools.partial(_ca_kernel_flat, inv_s=1.0 / S,
                                   s_total=S, s_tile=ts)
        x_spec = pl.BlockSpec((None, C, ts), lambda n, j: (n, 0, j))
        scratch = [pltpu.VMEM((C, 1), jnp.float32),
                   pltpu.VMEM((C, 1), jnp.float32)]

    # Double-buffered input tile + small margin; capped at 48 MiB so we never
    # request all of v7x's 64 MiB physical VMEM.
    vmem_limit = int(min(48 << 20, max(24 << 20, 2 * in_tile_bytes + (4 << 20))))

    out = pl.pallas_call(
        kernel,
        out_shape=out_shape,
        grid=grid,
        in_specs=[x_spec] + weight_specs,
        out_specs=out_spec,
        scratch_shapes=scratch,
        compiler_params=pltpu.CompilerParams(
            dimension_semantics=("parallel", "arbitrary"),
            vmem_limit_bytes=vmem_limit),
    )(xr, w1t, b1r, w2, b2c)

    return out.reshape((N, C) + (1,) * (x.ndim - 2))


# ----------------------------- reference & main ----------------------------------

def _reference(x, fc1_w, fc1_b, fc2_w, fc2_b):
    N, C = x.shape[0], x.shape[1]
    xr = x.reshape(N, C, -1)
    avg = jnp.mean(xr, axis=-1)
    mx = jnp.max(xr, axis=-1)

    def mlp(v):
        h = jnp.maximum(v @ fc1_w.T + fc1_b, 0.0)
        return h @ fc2_w.T + fc2_b

    out = jax.nn.sigmoid(mlp(avg) + mlp(mx))
    return out.reshape((N, C) + (1,) * (x.ndim - 2))


if __name__ == "__main__":
    key = jax.random.PRNGKey(0)
    N, C, D, H, W = 2, 4, 4, 8, 8
    M = 8
    kx, k1, k2, k3, k4, kx2 = jax.random.split(key, 6)

    x = jax.random.normal(kx, (N, C, D, H, W), jnp.float32)        # NCDHW
    fc1_w = 0.3 * jax.random.normal(k1, (M, C), jnp.float32)       # Linear(c_in, m_in)
    fc1_b = 0.1 * jax.random.normal(k2, (M,), jnp.float32)
    fc2_w = 0.3 * jax.random.normal(k3, (C, M), jnp.float32)       # Linear(m_in, c_in)
    fc2_b = 0.1 * jax.random.normal(k4, (C,), jnp.float32)

    # Main (sublane-packed) path: S = 4*8*8 = 256, divisible by 128.
    y = channel_attention(x, fc1_w, fc1_b, fc2_w, fc2_b)
    jax.block_until_ready(y)
    ref = _reference(x, fc1_w, fc1_b, fc2_w, fc2_b)
    assert y.shape == (N, C, 1, 1, 1) and y.dtype == x.dtype
    assert jnp.max(jnp.abs(y - ref)) < 1e-5, "channel attention mismatch (packed path)"

    # Fallback path: odd spatial size (S = 3*5*7 = 105), exercises cdiv + tail mask.
    x2 = jax.random.normal(kx2, (1, C, 3, 5, 7), jnp.float32)
    y2 = channel_attention(x2, fc1_w, fc1_b, fc2_w, fc2_b)
    jax.block_until_ready(y2)
    ref2 = _reference(x2, fc1_w, fc1_b, fc2_w, fc2_b)
    assert jnp.max(jnp.abs(y2 - ref2)) < 1e-5, "channel attention mismatch (flat path)"

    print("KERNEL_OK")
</pallas_src>

<mosaic_0001>
module attributes {stable_mosaic.version = 11 : i64} {
  func.func @_ca_kernel_packed(%arg0: i32, %arg1: i32, %arg2: memref<1x4x8x128xf32, #tpu.memory_space<vmem>>, %arg3: memref<4x8xf32, #tpu.memory_space<vmem>>, %arg4: memref<1x8xf32, #tpu.memory_space<vmem>>, %arg5: memref<4x8xf32, #tpu.memory_space<vmem>>, %arg6: memref<4x1xf32, #tpu.memory_space<vmem>>, %arg7: memref<1x4x1xf32, #tpu.memory_space<vmem>>, %arg8: memref<4x128xf32, #tpu.memory_space<vmem>>, %arg9: memref<4x128xf32, #tpu.memory_space<vmem>>) attributes {dimension_semantics = [#tpu.dimension_semantics<parallel>, #tpu.dimension_semantics<arbitrary>], iteration_bounds = array<i64: 2, 1>, scalar_prefetch = 0 : i64, scratch_operands = 2 : i64, tpu.core_type = #tpu.core_type<tc>, window_params = [{transform_indices = @transform_0, window_bounds = array<i64: 1, 4, 8, 128>}, {pipeline_mode = #tpu.pipeline_mode<synchronous>, transform_indices = @transform_1, window_bounds = array<i64: 4, 8>}, {pipeline_mode = #tpu.pipeline_mode<synchronous>, transform_indices = @transform_2, window_bounds = array<i64: 1, 8>}, {pipeline_mode = #tpu.pipeline_mode<synchronous>, transform_indices = @transform_3, window_bounds = array<i64: 4, 8>}, {pipeline_mode = #tpu.pipeline_mode<synchronous>, transform_indices = @transform_4, window_bounds = array<i64: 4, 1>}, {transform_indices = @transform_5, window_bounds = array<i64: 1, 4, 1>}]} {
    %c0_i32 = arith.constant 0 : i32
    %0 = arith.cmpi eq, %arg1, %c0_i32 : i32
    %1 = arith.extui %0 : i1 to i32
    %c0_i32_0 = arith.constant 0 : i32
    %2 = arith.cmpi ne, %1, %c0_i32_0 : i32
    scf.if %2 {
      %cst_17 = arith.constant 0.000000e+00 : f32
      %25 = vector.broadcast %cst_17 : f32 to vector<4x128xf32>
      %c0_18 = arith.constant 0 : index
      %c0_19 = arith.constant 0 : index
      %26 = vector.load %arg8[%c0_18, %c0_19] : memref<4x128xf32, #tpu.memory_space<vmem>>, vector<4x128xf32>
      tpu.vector_store %arg8[%c0_18, %c0_19], %25 {strides = array<i32>} : memref<4x128xf32, #tpu.memory_space<vmem>>, vector<4x128xf32>,
      %cst_20 = arith.constant 0xFF800000 : f32
      %27 = vector.broadcast %cst_20 : f32 to vector<4x128xf32>
      %c0_21 = arith.constant 0 : index
      %c0_22 = arith.constant 0 : index
      %28 = vector.load %arg9[%c0_21, %c0_22] : memref<4x128xf32, #tpu.memory_space<vmem>>, vector<4x128xf32>
      tpu.vector_store %arg9[%c0_21, %c0_22], %27 {strides = array<i32>} : memref<4x128xf32, #tpu.memory_space<vmem>>, vector<4x128xf32>,
    } else {
    }
    %c0 = arith.constant 0 : index
    %c0_1 = arith.constant 0 : index
    %c0_2 = arith.constant 0 : index
    %c0_3 = arith.constant 0 : index
    %3 = vector.load %arg2[%c0, %c0_1, %c0_2, %c0_3] : memref<1x4x8x128xf32, #tpu.memory_space<vmem>>, vector<1x4x8x128xf32>
    %4 = vector.shape_cast %3 : vector<1x4x8x128xf32> to vector<4x8x128xf32>
    %c8_i32 = arith.constant 8 : i32
    %5 = arith.muli %arg1, %c8_i32 : i32
    %c2_i32 = arith.constant 2 : i32
    %6 = arith.subi %c2_i32, %5 : i32
    %7 = tpu.iota {dimensions = array<i32: 1>} : vector<4x8x128xi32>
    %8 = vector.broadcast %6 : i32 to vector<4x8x128xi32>
    %9 = arith.cmpi slt, %7, %8 : vector<4x8x128xi32>
    %cst = arith.constant 0.000000e+00 : f32
    %10 = vector.broadcast %cst : f32 to vector<4x8x128xf32>
    %11 = arith.select %9, %4, %10 : vector<4x8x128xi1>, vector<4x8x128xf32>
    %cst_4 = arith.constant 0xFF800000 : f32
    %12 = vector.broadcast %cst_4 : f32 to vector<4x8x128xf32>
    %13 = arith.select %9, %4, %12 : vector<4x8x128xi1>, vector<4x8x128xf32>
    %c0_5 = arith.constant 0 : index
    %c0_6 = arith.constant 0 : index
    %14 = vector.load %arg8[%c0_5, %c0_6] : memref<4x128xf32, #tpu.memory_space<vmem>>, vector<4x128xf32>
    %cst_7 = arith.constant dense<0.000000e+00> : vector<4x128xf32>
    %15 = vector.multi_reduction <add>, %11, %cst_7 [1] : vector<4x8x128xf32> to vector<4x128xf32>
    %16 = arith.addf %14, %15 : vector<4x128xf32>
    %c0_8 = arith.constant 0 : index
    %c0_9 = arith.constant 0 : index
    %17 = vector.load %arg8[%c0_8, %c0_9] : memref<4x128xf32, #tpu.memory_space<vmem>>, vector<4x128xf32>
    tpu.vector_store %arg8[%c0_8, %c0_9], %16 {strides = array<i32>} : memref<4x128xf32, #tpu.memory_space<vmem>>, vector<4x128xf32>,
    %c0_10 = arith.constant 0 : index
    %c0_11 = arith.constant 0 : index
    %18 = vector.load %arg9[%c0_10, %c0_11] : memref<4x128xf32, #tpu.memory_space<vmem>>, vector<4x128xf32>
    %cst_12 = arith.constant dense<0xFF800000> : vector<4x128xf32>
    %19 = vector.multi_reduction <maximumf>, %13, %cst_12 [1] : vector<4x8x128xf32> to vector<4x128xf32>
    %20 = arith.maximumf %18, %19 : vector<4x128xf32>
    %c0_13 = arith.constant 0 : index
    %c0_14 = arith.constant 0 : index
    %21 = vector.load %arg9[%c0_13, %c0_14] : memref<4x128xf32, #tpu.memory_space<vmem>>, vector<4x128xf32>
    tpu.vector_store %arg9[%c0_13, %c0_14], %20 {strides = array<i32>} : memref<4x128xf32, #tpu.memory_space<vmem>>, vector<4x128xf32>,
    %c0_i32_15 = arith.constant 0 : i32
    %22 = arith.cmpi eq, %arg1, %c0_i32_15 : i32
    %23 = arith.extui %22 : i1 to i32
    %c0_i32_16 = arith.constant 0 : i32
    %24 = arith.cmpi ne, %23, %c0_i32_16 : i32
    scf.if %24 {
      %c0_17 = arith.constant 0 : index
      %c0_18 = arith.constant 0 : index
      %25 = vector.load %arg8[%c0_17, %c0_18] : memref<4x128xf32, #tpu.memory_space<vmem>>, vector<4x128xf32>
      %cst_19 = arith.constant dense<0.000000e+00> : vector<4xf32>
      %26 = vector.multi_reduction <add>, %25, %cst_19 [1] : vector<4x128xf32> to vector<4xf32>
      %27 = vector.shape_cast %26 : vector<4xf32> to vector<4x1xf32>
      %c0_20 = arith.constant 0 : index
      %c0_21 = arith.constant 0 : index
      %28 = vector.load %arg9[%c0_20, %c0_21] : memref<4x128xf32, #tpu.memory_space<vmem>>, vector<4x128xf32>
      %cst_22 = arith.constant dense<0xFF800000> : vector<4xf32>
      %29 = vector.multi_reduction <maximumf>, %28, %cst_22 [1] : vector<4x128xf32> to vector<4xf32>
      %30 = vector.shape_cast %29 : vector<4xf32> to vector<4x1xf32>
      %c0_23 = arith.constant 0 : index
      %c0_24 = arith.constant 0 : index
      %31 = vector.load %arg3[%c0_23, %c0_24] : memref<4x8xf32, #tpu.memory_space<vmem>>, vector<4x8xf32>
      %c0_25 = arith.constant 0 : index
      %c0_26 = arith.constant 0 : index
      %32 = vector.load %arg4[%c0_25, %c0_26] : memref<1x8xf32, #tpu.memory_space<vmem>>, vector<1x8xf32>
      %c0_27 = arith.constant 0 : index
      %c0_28 = arith.constant 0 : index
      %33 = vector.load %arg5[%c0_27, %c0_28] : memref<4x8xf32, #tpu.memory_space<vmem>>, vector<4x8xf32>
      %c0_29 = arith.constant 0 : index
      %c0_30 = arith.constant 0 : index
      %34 = vector.load %arg6[%c0_29, %c0_30] : memref<4x1xf32, #tpu.memory_space<vmem>>, vector<4x1xf32>
      %cst_31 = arith.constant 3.906250e-03 : f32
      %35 = vector.broadcast %cst_31 : f32 to vector<4x1xf32>
      %36 = arith.mulf %27, %35 : vector<4x1xf32>
      %37 = vector.broadcast %36 : vector<4x1xf32> to vector<4x8xf32>
      %38 = arith.mulf %31, %37 : vector<4x8xf32>
      %cst_32 = arith.constant dense<0.000000e+00> : vector<8xf32>
      %39 = vector.multi_reduction <add>, %38, %cst_32 [0] : vector<4x8xf32> to vector<8xf32>
      %40 = vector.shape_cast %39 : vector<8xf32> to vector<1x8xf32>
      %41 = arith.addf %40, %32 : vector<1x8xf32>
      %cst_33 = arith.constant 0.000000e+00 : f32
      %42 = vector.broadcast %cst_33 : f32 to vector<1x8xf32>
      %43 = arith.maximumf %41, %42 : vector<1x8xf32>
      %44 = vector.broadcast %43 : vector<1x8xf32> to vector<4x8xf32>
      %45 = arith.mulf %33, %44 : vector<4x8xf32>
      %cst_34 = arith.constant dense<0.000000e+00> : vector<4xf32>
      %46 = vector.multi_reduction <add>, %45, %cst_34 [1] : vector<4x8xf32> to vector<4xf32>
      %47 = vector.shape_cast %46 : vector<4xf32> to vector<4x1xf32>
      %48 = arith.addf %47, %34 : vector<4x1xf32>
      %49 = vector.broadcast %30 : vector<4x1xf32> to vector<4x8xf32>
      %50 = arith.mulf %31, %49 : vector<4x8xf32>
      %cst_35 = arith.constant dense<0.000000e+00> : vector<8xf32>
      %51 = vector.multi_reduction <add>, %50, %cst_35 [0] : vector<4x8xf32> to vector<8xf32>
      %52 = vector.shape_cast %51 : vector<8xf32> to vector<1x8xf32>
      %53 = arith.addf %52, %32 : vector<1x8xf32>
      %cst_36 = arith.constant 0.000000e+00 : f32
      %54 = vector.broadcast %cst_36 : f32 to vector<1x8xf32>
      %55 = arith.maximumf %53, %54 : vector<1x8xf32>
      %56 = vector.broadcast %55 : vector<1x8xf32> to vector<4x8xf32>
      %57 = arith.mulf %33, %56 : vector<4x8xf32>
      %cst_37 = arith.constant dense<0.000000e+00> : vector<4xf32>
      %58 = vector.multi_reduction <add>, %57, %cst_37 [1] : vector<4x8xf32> to vector<4xf32>
      %59 = vector.shape_cast %58 : vector<4xf32> to vector<4x1xf32>
      %60 = arith.addf %59, %34 : vector<4x1xf32>
      %61 = arith.addf %48, %60 : vector<4x1xf32>
      %62 = arith.negf %61 : vector<4x1xf32>
      %63 = math.exp %62 : vector<4x1xf32>
      %cst_38 = arith.constant 1.000000e+00 : f32
      %64 = vector.broadcast %cst_38 : f32 to vector<4x1xf32>
      %65 = arith.addf %64, %63 : vector<4x1xf32>
      %66 = arith.divf %64, %65 : vector<4x1xf32>
      %c0_39 = arith.constant 0 : index
      %c0_40 = arith.constant 0 : index
      %c0_41 = arith.constant 0 : index
      %67 = vector.load %arg7[%c0_39, %c0_40, %c0_41] : memref<1x4x1xf32, #tpu.memory_space<vmem>>, vector<1x4x1xf32>
      %68 = vector.shape_cast %67 : vector<1x4x1xf32> to vector<4x1xf32>
      %69 = vector.shape_cast %66 : vector<4x1xf32> to vector<1x4x1xf32>
      tpu.vector_store %arg7[%c0_39, %c0_40, %c0_41], %69 {strides = array<i32>} : memref<1x4x1xf32, #tpu.memory_space<vmem>>, vector<1x4x1xf32>,
    } else {
    }
    return
  }
  func.func @transform_0(%arg0: i32, %arg1: i32) -> (i32, i32, i32, i32) {
    %c0_i32 = arith.constant 0 : i32
    %c0_i32_0 = arith.constant 0 : i32
    %c0_i32_1 = arith.constant 0 : i32
    return %arg0, %c0_i32, %arg1, %c0_i32_0 : i32, i32, i32, i32
  }
  func.func @transform_1(%arg0: i32, %arg1: i32) -> (i32, i32) {
    %c0_i32 = arith.constant 0 : i32
    %c0_i32_0 = arith.constant 0 : i32
    %c0_i32_1 = arith.constant 0 : i32
    return %c0_i32, %c0_i32_0 : i32, i32
  }
  func.func @transform_2(%arg0: i32, %arg1: i32) -> (i32, i32) {
    %c0_i32 = arith.constant 0 : i32
    %c0_i32_0 = arith.constant 0 : i32
    %c0_i32_1 = arith.constant 0 : i32
    return %c0_i32, %c0_i32_0 : i32, i32
  }
  func.func @transform_3(%arg0: i32, %arg1: i32) -> (i32, i32) {
    %c0_i32 = arith.constant 0 : i32
    %c0_i32_0 = arith.constant 0 : i32
    %c0_i32_1 = arith.constant 0 : i32
    return %c0_i32, %c0_i32_0 : i32, i32
  }
  func.func @transform_4(%arg0: i32, %arg1: i32) -> (i32, i32) {
    %c0_i32 = arith.constant 0 : i32
    %c0_i32_0 = arith.constant 0 : i32
    %c0_i32_1 = arith.constant 0 : i32
    return %c0_i32, %c0_i32_0 : i32, i32
  }
  func.func @transform_5(%arg0: i32, %arg1: i32) -> (i32, i32, i32) {
    %c0_i32 = arith.constant 0 : i32
    %c0_i32_0 = arith.constant 0 : i32
    %c0_i32_1 = arith.constant 0 : i32
    return %arg0, %c0_i32, %c0_i32_0 : i32, i32, i32
  }
}

</mosaic_0001>

<llo_original>
// kernel: tpu_custom_call.1
$region0: #{tpu_custom_call.1}
  #allocation0 [shape = 'u32[]', space=smem, size = 0x4, offset = 0x4, fixed_abs, tag = 'smem constant byte address 0x4 - core index']
  #allocation1 [shape = 'u32[144,128]{1,0:T(1,128)}', space=vmem, size = 0x12000, scoped, tag = 'internal scratch']
  #allocation2 [shape = 'f32[4,128]{1,0:T(4,128)}', space=vmem, size = 0x800, scoped, tag = 'scratch operand']
  #allocation3 [shape = 'f32[4,128]{1,0:T(4,128)}', space=vmem, size = 0x800, scoped, tag = 'scratch operand']
  #allocation6 [shape = 's32[]', space=sflag, size = 0x4, offset = 0, fixed_abs, tag = 'sflag constant byte address 0x0 - dummy sync flag']
  %s0 = inlined_call_operand.hbm [shape: f32[2,4,2,128], index: 0, kind: input, shape index: {}]
  %s1 = inlined_call_operand.vmem [shape: f32[4,8], index: 1, kind: input, shape index: {}]
  %s2 = inlined_call_operand.vmem [shape: f32[1,8], index: 2, kind: input, shape index: {}]
  %s3 = inlined_call_operand.vmem [shape: f32[4,8], index: 3, kind: input, shape index: {}]
  %s4 = inlined_call_operand.vmem [shape: f32[4,1], index: 4, kind: input, shape index: {}]
  %s5 = inlined_call_operand.vmem [shape: f32[2,4,1], index: 5, kind: output, shape index: {}]
  %s6 = sld [smem:[#allocation0]]
  $region65: #{tpu_custom_call.1} parent=0
    _
  %s8 = ssub.s32 1, %s6
  %s9 = scalar_select 0, %s8, %s6
  $region1: #{tpu_custom_call.1} parent=0
    #allocation4 [shape = 'u8[32768]{0}', space=vmem, size = 0x8000, scoped, tag = 'input window, operand 0']
    #allocation5 [shape = 's32[2]{0}', space=sflag, size = 0x8, scoped, tag = 'scoped memory for tpu_custom_call.1']
    %10 = vsyncpa [#allocation5], 0
    %s11 = scalar_lea.sflag [#allocation5], 1
    %12 = vsyncpa %s11, 0
    loop: start=0, step=1, limit=4
    $region2: #{tpu_custom_call.1} parent=1 // loop_pre_header
      _
    $region3: #{tpu_custom_call.1} parent=1 // loop_header
      %s14 = sphi 0, %s18
      %p15 = scmp.ge.s32.totalorder %s14, 4
      %s21 = sphi 0, %s33
      %s22 = sphi 0, %s29
      %s23 = sphi 0, %s21
      %s24 = sphi 0, %s22
      %s25 = sphi 0, %s23
      %s26 = sphi 0, %s24
      %s38 = sphi 0, %s40
      %s41 = sphi 0, %s38
      %s42 = sphi 0, %s41
      %s58 = sphi 0, %s42
      %s62 = sphi 0, %s62
      %s64 = sphi 0, %s62
      %s65 = sphi 0, %s64
      %s79 = sphi 0, %s65
      %s83 = sphi 0, %s83
      %s85 = sphi 0, %s83
      %s86 = sphi 0, %s85
      %s100 = sphi 0, %s86
      %s104 = sphi 0, %s104
      %s106 = sphi 0, %s104
      %s107 = sphi 0, %s106
      %s121 = sphi 0, %s107
      %s125 = sphi 0, %s125
      %s127 = sphi 0, %s125
      %s128 = sphi 0, %s127
      %s142 = sphi 0, %s128
      %s148 = sphi 0, %s150
      %s151 = sphi 0, %s148
      %s152 = sphi 0, %s151
      %s168 = sphi 0, %s152
    $region4: #{tpu_custom_call.1} parent=1 // loop_header_branch
      %17 = sbr.rel (%p15) target = $region8
    $region5: #{tpu_custom_call.1} parent=1 // loop_body
      %s19 = ssub.s32 %s14, 1
      %s20 = ssub.s32 %s14, 2
      %s27 = sadd.s32 1, %s22
      %p28 = scmp.ge.s32.totalorder %s27, 1
      %s29 = scalar_select %p28, 0, %s27
      %s30 = sadd.s32 1, %s21
      %s31 = scalar_select %p28, %s30, %s21
      %p32 = scmp.ge.s32.totalorder %s31, 2
      %s33 = scalar_select %p32, 0, %s31
      %s34 = ssub.s32 %s21, %s33
      %s35 = ssub.s32 %s22, %s29
      %s36 = sor.u32 %s34, %s35
      %p37 = scmp.eq.s32.totalorder %s36, 0
      %s39 = sadd.s32 %s38, 1
      %s40 = scalar_select %p37, %s38, %s39
      %p43 = pneg %p37
      %p44 = scmp.eq.s32.totalorder %s14, 1
      %p45 = por %p43, %p44
      %p46 = scmp.ne.s32.totalorder %s38, %s41
      %p47 = scmp.eq.s32.totalorder %s14, 0
      %p48 = por %p46, %p47
      %p49 = scmp.ne.s32.totalorder %s38, %s41
      %p50 = scmp.eq.s32.totalorder %s19, 1
      %p51 = por %p49, %p50
      %p52 = scmp.ne.s32.totalorder %s41, %s42
      %p53 = scmp.eq.s32.totalorder %s19, 0
      %p54 = por %p52, %p53
      %p55 = scmp.ne.s32.totalorder %s41, %s42
      %p56 = scmp.eq.s32.totalorder %s20, 1
      %p57 = por %p55, %p56
      %p59 = scmp.ne.s32.totalorder %s42, %s58
      %p60 = scmp.eq.s32.totalorder %s20, 0
      %p61 = por %p59, %p60
      %s63 = sadd.s32 %s62, 1
      %p66 = scmp.eq.s32.totalorder %s14, 1
      %p67 = scmp.ne.s32.totalorder %s62, %s64
      %p68 = scmp.eq.s32.totalorder %s14, 0
      %p69 = por %p67, %p68
      %p70 = scmp.ne.s32.totalorder %s62, %s64
      %p71 = scmp.eq.s32.totalorder %s19, 1
      %p72 = por %p70, %p71
      %p73 = scmp.ne.s32.totalorder %s64, %s65
      %p74 = scmp.eq.s32.totalorder %s19, 0
      %p75 = por %p73, %p74
      %p76 = scmp.ne.s32.totalorder %s64, %s65
      %p77 = scmp.eq.s32.totalorder %s20, 1
      %p78 = por %p76, %p77
      %p80 = scmp.ne.s32.totalorder %s65, %s79
      %p81 = scmp.eq.s32.totalorder %s20, 0
      %p82 = por %p80, %p81
      %s84 = sadd.s32 %s83, 1
      %p87 = scmp.eq.s32.totalorder %s14, 1
      %p88 = scmp.ne.s32.totalorder %s83, %s85
      %p89 = scmp.eq.s32.totalorder %s14, 0
      %p90 = por %p88, %p89
      %p91 = scmp.ne.s32.totalorder %s83, %s85
      %p92 = scmp.eq.s32.totalorder %s19, 1
      %p93 = por %p91, %p92
      %p94 = scmp.ne.s32.totalorder %s85, %s86
      %p95 = scmp.eq.s32.totalorder %s19, 0
      %p96 = por %p94, %p95
      %p97 = scmp.ne.s32.totalorder %s85, %s86
      %p98 = scmp.eq.s32.totalorder %s20, 1
      %p99 = por %p97, %p98
      %p101 = scmp.ne.s32.totalorder %s86, %s100
      %p102 = scmp.eq.s32.totalorder %s20, 0
      %p103 = por %p101, %p102
      %s105 = sadd.s32 %s104, 1
      %p108 = scmp.eq.s32.totalorder %s14, 1
      %p109 = scmp.ne.s32.totalorder %s104, %s106
      %p110 = scmp.eq.s32.totalorder %s14, 0
      %p111 = por %p109, %p110
      %p112 = scmp.ne.s32.totalorder %s104, %s106
      %p113 = scmp.eq.s32.totalorder %s19, 1
      %p114 = por %p112, %p113
      %p115 = scmp.ne.s32.totalorder %s106, %s107
      %p116 = scmp.eq.s32.totalorder %s19, 0
      %p117 = por %p115, %p116
      %p118 = scmp.ne.s32.totalorder %s106, %s107
      %p119 = scmp.eq.s32.totalorder %s20, 1
      %p120 = por %p118, %p119
      %p122 = scmp.ne.s32.totalorder %s107, %s121
      %p123 = scmp.eq.s32.totalorder %s20, 0
      %p124 = por %p122, %p123
      %s126 = sadd.s32 %s125, 1
      %p129 = scmp.eq.s32.totalorder %s14, 1
      %p130 = scmp.ne.s32.totalorder %s125, %s127
      %p131 = scmp.eq.s32.totalorder %s14, 0
      %p132 = por %p130, %p131
      %p133 = scmp.ne.s32.totalorder %s125, %s127
      %p134 = scmp.eq.s32.totalorder %s19, 1
      %p135 = por %p133, %p134
      %p136 = scmp.ne.s32.totalorder %s127, %s128
      %p137 = scmp.eq.s32.totalorder %s19, 0
      %p138 = por %p136, %p137
      %p139 = scmp.ne.s32.totalorder %s127, %s128
      %p140 = scmp.eq.s32.totalorder %s20, 1
      %p141 = por %p139, %p140
      %p143 = scmp.ne.s32.totalorder %s128, %s142
      %p144 = scmp.eq.s32.totalorder %s20, 0
      %p145 = por %p143, %p144
      %s146 = ssub.s32 %s21, %s33
      %p147 = scmp.eq.s32.totalorder %s146, 0
      %s149 = sadd.s32 %s148, 1
      %s150 = scalar_select %p147, %s148, %s149
      %p153 = pneg %p147
      %p154 = scmp.eq.s32.totalorder %s14, 1
      %p155 = por %p153, %p154
      %p156 = scmp.ne.s32.totalorder %s148, %s151
      %p157 = scmp.eq.s32.totalorder %s14, 0
      %p158 = por %p156, %p157
      %p159 = scmp.ne.s32.totalorder %s148, %s151
      %p160 = scmp.eq.s32.totalorder %s19, 1
      %p161 = por %p159, %p160
      %p162 = scmp.ne.s32.totalorder %s151, %s152
      %p163 = scmp.eq.s32.totalorder %s19, 0
      %p164 = por %p162, %p163
      %p165 = scmp.ne.s32.totalorder %s151, %s152
      %p166 = scmp.eq.s32.totalorder %s20, 1
      %p167 = por %p165, %p166
      %p169 = scmp.ne.s32.totalorder %s152, %s168
      %p170 = scmp.eq.s32.totalorder %s20, 0
      %p171 = por %p169, %p170
      %p172 = scmp.le.s32.totalorder 1, %s14
      %p173 = scmp.lt.s32.totalorder %s14, 3
      %p174 = pnand %p172, %p173
      %p175 = pneg %p174
      // Predicated region
      $region9: #{tpu_custom_call.1} parent=5 // pred_check
        _
      $region10: #{tpu_custom_call.1} parent=5 // pred_check_branch
        %177 = sbr.rel (%p174) target = $region12
      $region11: #{tpu_custom_call.1} parent=5 // pred_region
        %s178 = ssub.s32 %s14, 1
        // Predicated region
        $region13: #{tpu_custom_call.1} parent=11 // pred_check
          %p179 = pneg %p75
        $region14: #{tpu_custom_call.1} parent=11 // pred_check_branch
          %181 = sbr.rel (%p179) target = $region16
        $region15: #{tpu_custom_call.1} parent=11 // pred_region
          _
        $region16: #{tpu_custom_call.1} parent=11 // pred_fallthru
          _
        // Predicated region
        $region17: #{tpu_custom_call.1} parent=11 // pred_check
          %p182 = pneg %p96
        $region18: #{tpu_custom_call.1} parent=11 // pred_check_branch
          %184 = sbr.rel (%p182) target = $region20
        $region19: #{tpu_custom_call.1} parent=11 // pred_region
          _
        $region20: #{tpu_custom_call.1} parent=11 // pred_fallthru
          _
        // Predicated region
        $region21: #{tpu_custom_call.1} parent=11 // pred_check
          %p185 = pneg %p117
        $region22: #{tpu_custom_call.1} parent=11 // pred_check_branch
          %187 = sbr.rel (%p185) target = $region24
        $region23: #{tpu_custom_call.1} parent=11 // pred_region
          _
        $region24: #{tpu_custom_call.1} parent=11 // pred_fallthru
          _
        // Predicated region
        $region25: #{tpu_custom_call.1} parent=11 // pred_check
          %p188 = pneg %p138
        $region26: #{tpu_custom_call.1} parent=11 // pred_check_branch
          %190 = sbr.rel (%p188) target = $region28
        $region27: #{tpu_custom_call.1} parent=11 // pred_region
          _
        $region28: #{tpu_custom_call.1} parent=11 // pred_fallthru
          _
      $region12: #{tpu_custom_call.1} parent=5 // pred_fallthru
        _
      %p191 = scmp.lt.s32.totalorder %s14, 2
      // Predicated region
      $region29: #{tpu_custom_call.1} parent=5 // pred_check
        %p192 = pneg %p191
      $region30: #{tpu_custom_call.1} parent=5 // pred_check_branch
        %194 = sbr.rel (%p192) target = $region32
      $region31: #{tpu_custom_call.1} parent=5 // pred_region
        // Predicated region
        $region33: #{tpu_custom_call.1} parent=31 // pred_check
          %p195 = pneg %p48
        $region34: #{tpu_custom_call.1} parent=31 // pred_check_branch
          %197 = sbr.rel (%p195) target = $region36
        $region35: #{tpu_custom_call.1} parent=31 // pred_region
          #allocation7 [shape = 'u32[6]{0}', space=smem, size = 0x18, scoped, tag = 'DMA stride descriptor']
          %s198 = sand.u32 %s38, 1
          %s199 = scalar_lea.sflag [#allocation5], %s198
          %s200 = sand.u32 %s38, 1
          %s201 = smul.addr %s200, 32
          %s202 = scalar_lea.vmem [#allocation4], %s201
          %s203 = smul.u32 4, %s22
          %s204 = ssub.s32 1, %s203
          %s205 = smul.u32 128, %s204
          %s207 = ssub.s32 512, %s205
          %208 = vsyncadd %s199, %s207
          %p209 = scmp.ne.s32.totalorder 0, %s205
          %s210 = smul.addr %s21, 4
          %s211 = sadd.s32 %s203, %s210
          %s212 = smul.addr %s211, 32
          %s213 = scalar_lea.hbm %s0, %s212
          %s214 = smul.u32 2, %s204
          %s215 = smul.u32 %s214, 4
          %s217 = sshll.u32 1, 14
          %s218 = sxor.u32 4294967295, %s217
          %s220 = sld [smem:[#allocation0]]
          %s221 = sadd.s32 2, %s220
          %s223 = sshll.u32 7, 26
          %s224 = sxor.u32 4294967295, %s223
          %s225 = sand.u32 0, %s224
          %s226 = sshll.u32 %s221, 26
          %s227 = sor.u32 %s225, %s226
          %s228 = sshll.u32 %s202, 4
          %s229 = int_to_ptr.vmem [resolvable:$true] %s228
          %s230 = sshll.u32 %s215, 4
          %235 = sst [smem:[#allocation7]] 32
          %s236 = scalar_lea.smem [#allocation7], 1
          %237 = sst [smem:[%s236]] 128
          %s238 = scalar_lea.smem [#allocation7], 2
          %239 = sst [smem:[%s238]] %s204
          %s240 = scalar_lea.smem [#allocation7], 3
          %241 = sst [smem:[%s240]] 32
          %s242 = scalar_lea.smem [#allocation7], 4
          %243 = sst [smem:[%s242]] 32
          %s244 = scalar_lea.smem [#allocation7], 5
          %245 = sst [smem:[%s244]] 2
          %247 = dma.general (%p209), %s213, %s230, %s229, %s199, [#allocation6], [#allocation7], %s227, 0
        $region36: #{tpu_custom_call.1} parent=31 // pred_fallthru
          _
      $region32: #{tpu_custom_call.1} parent=5 // pred_fallthru
        _
      %p248 = scmp.le.s32.totalorder 1, %s14
      %p249 = scmp.lt.s32.totalorder %s14, 3
      %p250 = pnand %p248, %p249
      %p251 = pneg %p250
      // Predicated region
      $region37: #{tpu_custom_call.1} parent=5 // pred_check
        _
      $region38: #{tpu_custom_call.1} parent=5 // pred_check_branch
        %253 = sbr.rel (%p250) target = $region40
      $region39: #{tpu_custom_call.1} parent=5 // pred_region
        %s254 = ssub.s32 %s14, 1
        %s255 = sand.u32 %s41, 1
        %s256 = scalar_lea.sflag [#allocation5], %s255
        %s257 = sand.u32 %s41, 1
        %s258 = smul.addr %s257, 32
        %s259 = scalar_lea.vmem [#allocation4], %s258
        // Predicated region
        $region41: #{tpu_custom_call.1} parent=39 // pred_check
          %p260 = pneg %p54
        $region42: #{tpu_custom_call.1} parent=39 // pred_check_branch
          %262 = sbr.rel (%p260) target = $region44
        $region43: #{tpu_custom_call.1} parent=39 // pred_region
          %263 = dma.done %s256, 512
        $region44: #{tpu_custom_call.1} parent=39 // pred_fallthru
          _
        %s264 = sand.u32 %s41, 1
        %s265 = scalar_lea.sflag [#allocation5], %s264
        %s266 = sand.u32 %s41, 1
        %s267 = smul.addr %s266, 32
        %s268 = scalar_lea.vmem [#allocation4], %s267
        %p269 = pneg %p54
        %p270 = pneg %p51
        %p271 = pneg %p75
        %p272 = pneg %p72
        %p273 = pneg %p96
        %p274 = pneg %p93
        %p275 = pneg %p117
        %p276 = pneg %p114
        %p277 = pneg %p138
        %p278 = pneg %p135
        %p279 = pneg %p164
        %p280 = pneg %p161
        %p281 = scmp.lt.s32.totalorder %s23, 1
        %s282 = scalar_select %p281, %s23, 1
        %s283 = smul.addr %s282, 4
        %s284 = scalar_lea.vmem %s5, %s283
        %s285 = smul.u32 4, %s24
        %s286 = ssub.s32 1, %s285
        %s287 = smul.u32 128, %s286
        %p288 = scmp.lt.s32.totalorder %s23, 1
        %s289 = scalar_select %p288, %s23, 1
        %s290 = smul.addr %s289, 4
        %s291 = scalar_lea.vmem %s5, %s290
        %p292 = scmp.eq.s32.totalorder %s24, 0
        // Predicated region
        $region45: #{tpu_custom_call.1} parent=39 // pred_check
          %p293 = pneg %p292
        $region46: #{tpu_custom_call.1} parent=39 // pred_check_branch
          %295 = sbr.rel (%p293) target = $region48
        $region47: #{tpu_custom_call.1} parent=39 // pred_region
          %296 = vst [vmem:[#allocation2] sm:$0xf] 0.0
          %297 = vst [vmem:[#allocation3] sm:$0xf] -inf
        $region48: #{tpu_custom_call.1} parent=39 // pred_fallthru
          _
        %v298 = vld [vmem:[%s259] sm:$0xff]
        %v299 = vld [vmem:[%s259 + $0x8] sm:$0xff]
        %v300 = vld [vmem:[%s259 + $0x10] sm:$0xff]
        %v301 = vld [vmem:[%s259 + $0x18] sm:$0xff]
        %s302 = smul.u32 %s24, 8
        %s303 = ssub.s32 2, %s302
        %v304 = vlaneseq
        %v305 = vshrl.u32 %v304, 7
        %v306 = vstv %s303
        %vm307 = vcmp.lt.s32.totalorder %v305, %v306
        %v308 = vsel %vm307, %v298, 0.0
        %v309 = vsel %vm307, %v299, 0.0
        %v310 = vsel %vm307, %v300, 0.0
        %v311 = vsel %vm307, %v301, 0.0
        %v312 = vsel %vm307, %v298, -inf
        %v313 = vsel %vm307, %v299, -inf
        %v314 = vsel %vm307, %v300, -inf
        %v315 = vsel %vm307, %v301, -inf
        %v316 = vld [vmem:[#allocation2] sm:$0xf]
        %v317 = vrot.slane %v308, 4
        %v318 = vadd.f32 %v308, %v317
        %v319 = vrot.slane %v318, 2
        %v320 = vadd.f32 %v318, %v319
        %v321 = vrot.slane %v320, 1
        %v322 = vadd.f32 %v320, %v321
        %v323 = vrot.slane %v309, 4
        %v324 = vadd.f32 %v309, %v323
        %v325 = vrot.slane %v324, 2
        %v326 = vadd.f32 %v324, %v325
        %v327 = vrot.slane %v326, 1
        %v328 = vadd.f32 %v326, %v327
        %v329 = vrot.slane %v310, 4
        %v330 = vadd.f32 %v310, %v329
        %v331 = vrot.slane %v330, 2
        %v332 = vadd.f32 %v330, %v331
        %v333 = vrot.slane %v332, 1
        %v334 = vadd.f32 %v332, %v333
        %v335 = vrot.slane %v311, 4
        %v336 = vadd.f32 %v311, %v335
        %v337 = vrot.slane %v336, 2
        %v338 = vadd.f32 %v336, %v337
        %v339 = vrot.slane %v338, 1
        %v340 = vadd.f32 %v338, %v339
        %vm345 = vcmask 1041409
        %v346 = vsel %vm345, %v328, %v322
        %vm347 = vcmask 1042434
        %v348 = vsel %vm347, %v334, %v346
        %vm349 = vcmask 1043459
        %v350 = vsel %vm349, %v340, %v348
        %v352 = vadd.f32 %v316, %v350
        %353 = vst [vmem:[#allocation2] sm:$0xf] %v352
        %v354 = vld [vmem:[#allocation3] sm:$0xf]
        %v355 = vrot.slane %v312, 4
        %v356 = vmax.f32 %v312, %v355
        %v357 = vrot.slane %v356, 2
        %v358 = vmax.f32 %v356, %v357
        %v359 = vrot.slane %v358, 1
        %v360 = vmax.f32 %v358, %v359
        %v361 = vrot.slane %v313, 4
        %v362 = vmax.f32 %v313, %v361
        %v363 = vrot.slane %v362, 2
        %v364 = vmax.f32 %v362, %v363
        %v365 = vrot.slane %v364, 1
        %v366 = vmax.f32 %v364, %v365
        %v367 = vrot.slane %v314, 4
        %v368 = vmax.f32 %v314, %v367
        %v369 = vrot.slane %v368, 2
        %v370 = vmax.f32 %v368, %v369
        %v371 = vrot.slane %v370, 1
        %v372 = vmax.f32 %v370, %v371
        %v373 = vrot.slane %v315, 4
        %v374 = vmax.f32 %v315, %v373
        %v375 = vrot.slane %v374, 2
        %v376 = vmax.f32 %v374, %v375
        %v377 = vrot.slane %v376, 1
        %v378 = vmax.f32 %v376, %v377
        %v383 = vsel %vm345, %v366, %v360
        %v384 = vsel %vm347, %v372, %v383
        %v385 = vsel %vm349, %v378, %v384
        %v387 = vmax.f32 %v354, %v385
        %388 = vst [vmem:[#allocation3] sm:$0xf] %v387
        // Predicated region
        $region49: #{tpu_custom_call.1} parent=39 // pred_check
          %p389 = pneg %p292
        $region50: #{tpu_custom_call.1} parent=39 // pred_check_branch
          %391 = sbr.rel (%p389) target = $region52
        $region51: #{tpu_custom_call.1} parent=39 // pred_region
          %v392 = vld [vmem:[#allocation2] sm:$0xf]
          %vm393 = vcmask 1043456
          %v394 = vsel %vm393, %v392, 0.0
          %395 = vadd.xlane.f32.xlu0 %v394
          %v396 = vpop.xlane.xlu0 %395
          %v397 = vld [vmem:[#allocation3] sm:$0xf]
          %v398 = vsel %vm393, %v397, -inf
          %399 = vmax.xlane.f32.xlu0 %v398
          %v400 = vpop.xlane.xlu0 %399
          %v401 = vld [vmem:[%s1] sm:$0xf]
          %v402 = vld [vmem:[%s2] sm:$0x1]
          %v403 = vld [vmem:[%s3] sm:$0xf]
          %v404 = vld [vmem:[%s4] sm:$0xf]
          %v405 = vmul.f32 %v396, 0.00390625
          %v406 = vmul.f32 %v401, %v405
          %vm407 = vcmask 60416
          %v408 = vsel %vm407, %v406, 0.0
          %v409 = vrot.slane %v408, 4
          %v410 = vadd.f32 %v408, %v409
          %v411 = vrot.slane %v410, 2
          %v412 = vadd.f32 %v410, %v411
          %v413 = vrot.slane %v412, 1
          %v414 = vadd.f32 %v412, %v413
          %v415 = vadd.f32 %v414, %v402
          %v416 = vmax.f32 %v415, 0.0
          %v417 = vlaneseq
          %v418 = vshrl.u32 %v417, 7
          %v419 = vsub.s32 0, %v418
          %v420 = vrot.slane %v416, %v419
          %v421 = vmul.f32 %v403, %v420
          %v422 = vsel %vm407, %v421, 0.0
          %423 = vadd.xlane.f32.xlu0 %v422
          %v424 = vpop.xlane.xlu0 %423
          %v425 = vadd.f32 %v424, %v404
          %v426 = vmul.f32 %v401, %v400
          %v427 = vsel %vm407, %v426, 0.0
          %v428 = vrot.slane %v427, 4
          %v429 = vadd.f32 %v427, %v428
          %v430 = vrot.slane %v429, 2
          %v431 = vadd.f32 %v429, %v430
          %v432 = vrot.slane %v431, 1
          %v433 = vadd.f32 %v431, %v432
          %v434 = vadd.f32 %v433, %v402
          %v435 = vmax.f32 %v434, 0.0
          %v436 = vlaneseq
          %v437 = vshrl.u32 %v436, 7
          %v438 = vsub.s32 0, %v437
          %v439 = vrot.slane %v435, %v438
          %v440 = vmul.f32 %v403, %v439
          %v441 = vsel %vm407, %v440, 0.0
          %442 = vadd.xlane.f32.xlu0 %v441
          %v443 = vpop.xlane.xlu0 %442
          %v444 = vadd.f32 %v443, %v404
          %v445 = vadd.f32 %v425, %v444
          %v446 = vxor.u32 %v445, 2147483648
          %v447 = vmul.f32 %v446, 1.442695
          %v448 = vpow.pop %v447
          %v449 = vadd.f32 %v448, 1.0
          %v450 = vrcp.pop %v449
          %v451 = vmul.f32 1.0, %v450
          %vm452 = vcmask 3072
          %453 = vst.msk [vmem:[%s291] sm:$0xf] %vm452, %v451
        $region52: #{tpu_custom_call.1} parent=39 // pred_fallthru
          _
        %p454 = scmp.lt.s32.totalorder %s23, 1
        %s455 = scalar_select %p454, %s23, 1
        %s456 = smul.addr %s455, 4
        %s457 = scalar_lea.vmem %s5, %s456
        // Predicated region
        $region53: #{tpu_custom_call.1} parent=39 // pred_check
          %p458 = pneg %p161
        $region54: #{tpu_custom_call.1} parent=39 // pred_check_branch
          %460 = sbr.rel (%p458) target = $region56
        $region55: #{tpu_custom_call.1} parent=39 // pred_region
          _
        $region56: #{tpu_custom_call.1} parent=39 // pred_fallthru
          _
      $region40: #{tpu_custom_call.1} parent=5 // pred_fallthru
        _
      %p461 = scmp.le.s32.totalorder 2, %s14
      // Predicated region
      $region57: #{tpu_custom_call.1} parent=5 // pred_check
        %p462 = pneg %p461
      $region58: #{tpu_custom_call.1} parent=5 // pred_check_branch
        %464 = sbr.rel (%p462) target = $region60
      $region59: #{tpu_custom_call.1} parent=5 // pred_region
        %s465 = ssub.s32 %s14, 2
        // Predicated region
        $region61: #{tpu_custom_call.1} parent=59 // pred_check
          %p466 = pneg %p167
        $region62: #{tpu_custom_call.1} parent=59 // pred_check_branch
          %468 = sbr.rel (%p466) target = $region64
        $region63: #{tpu_custom_call.1} parent=59 // pred_region
          %p469 = scmp.lt.s32.totalorder %s25, 1
          %s470 = scalar_select %p469, %s25, 1
          %s471 = smul.addr %s470, 4
          %s472 = scalar_lea.vmem %s5, %s471
        $region64: #{tpu_custom_call.1} parent=59 // pred_fallthru
          _
      $region60: #{tpu_custom_call.1} parent=5 // pred_fallthru
        _
    $region6: #{tpu_custom_call.1} parent=1 // loop_footer
      %s18 = sadd.s32 1, %s14
    $region7: #{tpu_custom_call.1} parent=1 // loop_footer_branch
      %13 = sbr.rel target = $region3
    $region8: #{tpu_custom_call.1} parent=1 // loop_exit
      _
    %473 = vsyncpa [#allocation5], 1
    %s474 = scalar_lea.sflag [#allocation5], 1
    %475 = vsyncpa %s474, 1

</llo_original>
